<compile_context>
chip_gen: v7x
topology: tpu7x:2x2x1
jax: 0.10.0
libtpu: 0.0.40
codegen_flags: <defaults>
</compile_context>

<pallas_src>
import jax
import jax.numpy as jnp
from jax.experimental import pallas as pl
from jax.experimental.pallas import tpu as pltpu


def _scale_kernel(loss_ref, w_ref, out_ref):
    # Pure scalar-unit work: two SMEM loads, one multiply, one SMEM store.
    out_ref[0, 0] = loss_ref[0, 0] * w_ref[0, 0]


def _weighted_loss_impl(loss_f32, w_f32):
    """loss_f32, w_f32: 0-d float32 arrays. Returns 0-d float32 array."""
    out = pl.pallas_call(
        _scale_kernel,
        out_shape=jax.ShapeDtypeStruct((1, 1), jnp.float32),
        # Grid-less call; all three scalars live in SMEM — no vreg traffic,
        # no masked partial stores, no software pipeline.
        in_specs=[
            pl.BlockSpec(memory_space=pltpu.MemorySpace.SMEM),
            pl.BlockSpec(memory_space=pltpu.MemorySpace.SMEM),
        ],
        out_specs=pl.BlockSpec(memory_space=pltpu.MemorySpace.SMEM),
    )(loss_f32.reshape(1, 1), w_f32.reshape(1, 1))
    return out[0, 0]


@jax.custom_vjp
def _weighted_loss(loss_f32, w_f32):
    return _weighted_loss_impl(loss_f32, w_f32)


def _weighted_loss_fwd(loss_f32, w_f32):
    return _weighted_loss_impl(loss_f32, w_f32), (loss_f32, w_f32)


def _weighted_loss_bwd(res, g):
    loss_f32, w_f32 = res
    # d(loss*w)/d loss = w ; d(loss*w)/d w = loss
    return (g * w_f32, g * loss_f32)


_weighted_loss.defvjp(_weighted_loss_fwd, _weighted_loss_bwd)


def custom_loss(frob_loss, weight=1.0):
    """JAX/Pallas equivalent of CustomLoss.forward.

    frob_loss: python float or 0-d array (the scalar Frobenius loss).
    weight:    python float (static) or 0-d array (trainable) scale.
    Returns a 0-d array in the input's floating dtype.
    """
    loss = jnp.asarray(frob_loss)
    if not jnp.issubdtype(loss.dtype, jnp.floating):
        loss = loss.astype(jnp.float32)
    out_dtype = loss.dtype

    # Trace-time short-circuit: with the module default weight == 1.0 the op
    # is an identity — skip the pallas_call (and its ~µs launch cost) entirely.
    if isinstance(weight, (int, float)) and float(weight) == 1.0:
        return loss.reshape(())

    w = jnp.asarray(weight, dtype=jnp.float32).reshape(())
    out = _weighted_loss(loss.astype(jnp.float32).reshape(()), w)
    return out.astype(out_dtype)


if __name__ == "__main__":
    key = jax.random.PRNGKey(0)
    # Synthetic scalar "frobenius loss" input.
    frob_loss = jax.random.uniform(key, (), dtype=jnp.float32) * 10.0

    # Path 1: default weight=1.0 -> trace-time identity, no kernel launch.
    res_identity = custom_loss(frob_loss)  # weight defaults to 1.0
    jax.block_until_ready(res_identity)
    assert jnp.allclose(res_identity, frob_loss), (res_identity, frob_loss)

    # Path 2: non-trivial weight -> Pallas kernel actually runs.
    weight = 2.5
    res_scaled = custom_loss(frob_loss, weight=weight)
    jax.block_until_ready(res_scaled)
    expected = jnp.asarray(frob_loss, dtype=jnp.float32) * weight
    assert jnp.allclose(res_scaled, expected), (res_scaled, expected)

    # Backprop through the kernel works via the custom_vjp (loss head use case).
    g = jax.grad(lambda x: custom_loss(x, weight=weight))(frob_loss)
    jax.block_until_ready(g)
    assert jnp.allclose(g, jnp.float32(weight)), (g, weight)

    print("KERNEL_OK")
</pallas_src>

<mosaic_0001>
module attributes {stable_mosaic.version = 11 : i64} {
  func.func @_scale_kernel(%arg0: memref<1x1xf32, #tpu.memory_space<smem>>, %arg1: memref<1x1xf32, #tpu.memory_space<smem>>, %arg2: memref<1x1xf32, #tpu.memory_space<smem>>) attributes {dimension_semantics = [], scalar_prefetch = 0 : i64, scratch_operands = 0 : i64, tpu.core_type = #tpu.core_type<tc>} {
    %c0 = arith.constant 0 : index
    %c0_0 = arith.constant 0 : index
    %0 = memref.load %arg0[%c0, %c0_0] : memref<1x1xf32, #tpu.memory_space<smem>>
    %c0_1 = arith.constant 0 : index
    %c0_2 = arith.constant 0 : index
    %1 = memref.load %arg1[%c0_1, %c0_2] : memref<1x1xf32, #tpu.memory_space<smem>>
    %2 = arith.mulf %0, %1 : f32
    %c0_3 = arith.constant 0 : index
    %c0_4 = arith.constant 0 : index
    %3 = memref.load %arg2[%c0_3, %c0_4] : memref<1x1xf32, #tpu.memory_space<smem>>
    memref.store %2, %arg2[%c0_3, %c0_4] : memref<1x1xf32, #tpu.memory_space<smem>>
    return
  }
}

</mosaic_0001>

<llo_original>
// kernel: tpu_custom_call.1
$region0: #{tpu_custom_call.1}
  #allocation0 [shape = 'u32[]', space=smem, size = 0x4, offset = 0x4, fixed_abs, tag = 'smem constant byte address 0x4 - core index']
  #allocation1 [shape = 'u32[144,128]{1,0:T(1,128)}', space=vmem, size = 0x12000, scoped, tag = 'internal scratch']
  #allocation2 [shape = 'f32[1,1]{1,0:T(1,128)S(6)}', space=smem, size = 0x200, scoped, tag = 'scoped memory for tpu_custom_call.1']
  #allocation3 [shape = 'f32[1,1]{1,0:T(1,128)S(6)}', space=smem, size = 0x200, scoped, tag = 'scoped memory for tpu_custom_call.1']
  %s0 = inlined_call_operand.<no memory space> [shape: f32[1,1], index: 0, kind: input, shape index: {}]
  %s1 = inlined_call_operand.<no memory space> [shape: f32[1,1], index: 1, kind: input, shape index: {}]
  %s2 = inlined_call_operand.hbm [shape: f32[1,1], index: 2, kind: output, shape index: {}]
  %s3 = sld [smem:[#allocation0]]
  $region18: #{tpu_custom_call.1} parent=0
    _
  %s5 = ssub.s32 1, %s3
  %s6 = scalar_select 0, %s5, %s3
  %7 = sst [smem:[#allocation2]] %s0
  %8 = sst [smem:[#allocation3]] %s1
  $region1: #{tpu_custom_call.1} parent=0
    #allocation4 [shape = 'u8[512]{0}', space=smem, size = 0x200, scoped, tag = 'output window, operand 0, single buffered']
    #allocation5 [shape = 's32[1]{0}', space=sflag, size = 0x4, scoped, tag = 'scoped memory for tpu_custom_call.1']
    %9 = vsyncpa [#allocation5], 0
    // Predicated region
    $region2: #{tpu_custom_call.1} parent=1 // pred_check
      _
    $region3: #{tpu_custom_call.1} parent=1 // pred_check_branch
      %11 = sbr.rel (0) target = $region5
    $region4: #{tpu_custom_call.1} parent=1 // pred_region
      _
    $region5: #{tpu_custom_call.1} parent=1 // pred_fallthru
      _
    // Predicated region
    $region6: #{tpu_custom_call.1} parent=1 // pred_check
      _
    $region7: #{tpu_custom_call.1} parent=1 // pred_check_branch
      %13 = sbr.rel (0) target = $region9
    $region8: #{tpu_custom_call.1} parent=1 // pred_region
      _
    $region9: #{tpu_custom_call.1} parent=1 // pred_fallthru
      _
    %s14 = sld [smem:[#allocation2]]
    %s15 = sld [smem:[#allocation3]]
    %s16 = smul.f32 %s14, %s15
    %s17 = scalar_lea.smem [#allocation4], 0
    %18 = sst [smem:[%s17]] %s16
    // Predicated region
    $region10: #{tpu_custom_call.1} parent=1 // pred_check
      _
    $region11: #{tpu_custom_call.1} parent=1 // pred_check_branch
      %20 = sbr.rel (0) target = $region13
    $region12: #{tpu_custom_call.1} parent=1 // pred_region
      %s22 = ssub.s32 16, 16
      %23 = vsyncadd [#allocation5], %s22
      %26 = dma.smem_to_hbm [#allocation4], 16, %s2, [#allocation5]
    $region13: #{tpu_custom_call.1} parent=1 // pred_fallthru
      _
    // Predicated region
    $region14: #{tpu_custom_call.1} parent=1 // pred_check
      _
    $region15: #{tpu_custom_call.1} parent=1 // pred_check_branch
      %28 = sbr.rel (0) target = $region17
    $region16: #{tpu_custom_call.1} parent=1 // pred_region
      %29 = dma.done [#allocation5], 16
    $region17: #{tpu_custom_call.1} parent=1 // pred_fallthru
      _
    %30 = sfence
    %31 = vsyncpa [#allocation5], 1

</llo_original>
